<compile_context>
chip_gen: v7x
topology: tpu7x:2x2x1
jax: 0.10.0
libtpu: 0.0.40
codegen_flags: <defaults>
</compile_context>

<pallas_src>
import numpy as np
import jax
import jax.numpy as jnp
from jax.experimental import pallas as pl
from jax.experimental.pallas import tpu as pltpu


MXU_DTYPE = jnp.bfloat16   # MXU operands (bf16-native on v5e/v6e/v7x)
ACC_DTYPE = jnp.float32    # accumulation + all VPU/EUP (softmax) math


# ----------------------------------------------------------------------------
# helpers
# ----------------------------------------------------------------------------

def _vmem_ceiling_bytes():
    """~85% of the local generation's physical VMEM (leaves headroom for
    compiler scratch / semaphores / double buffers); safe fallback if the
    hardware query is unavailable."""
    try:
        cap = int(pltpu.get_tpu_info().vmem_capacity_bytes)
    except Exception:
        cap = 0
    if cap <= 0:
        cap = 64 * 2**20          # conservative: safe on every generation
    return int(0.85 * cap)


def _clamp_vmem(estimate_bytes):
    ceiling = _vmem_ceiling_bytes()
    return int(min(max(2 * estimate_bytes, 32 * 2**20), ceiling))


def _default_tiles():
    """Generation-aware tile targets: bigger K tiles on 128 MiB parts
    (v5e/v6e), smaller on v7x's 64 MiB."""
    if _vmem_ceiling_bytes() >= 80 * 2**20:
        return 256, 256, 512      # v5e / v6e
    return 256, 256, 256          # v7x


def _choose_tile(n, target, lane=False):
    """Largest tile <= target dividing n.  Lane dims prefer multiples of 128
    (lane-dense vregs); sublane dims need multiples of 8 (the (8,128) rule),
    unless the tile spans the full dimension."""
    if n <= target:
        return n
    if lane:
        for t in range(min(target, n), 0, -1):
            if n % t == 0 and t % 128 == 0:
                return t
    for t in range(min(target, n), 0, -1):
        if n % t == 0 and t % 8 == 0:
            return t
    return n


def _weight_spec(shape, index_map):
    """BlockSpec for a resident (constant-index) operand: request single
    buffering so large weight tiles are not doubled in VMEM."""
    try:
        return pl.BlockSpec(shape, index_map, pipeline_mode=pl.Buffered(1))
    except Exception:  # older jax without BlockSpec.pipeline_mode / Buffered
        return pl.BlockSpec(shape, index_map)


def _qkv_col_perm(emb_dim, num_heads):
    """Map nn.Linear(qkv) output ordering '(h d qkv)' (qkv innermost, per
    einops) to the kernel layout [q | k | v], each block head-major."""
    E = emb_dim
    d = E // num_heads
    j_old = np.arange(3 * E)
    q3 = j_old % 3
    dd = (j_old // 3) % d
    h = j_old // (3 * d)
    j_new = q3 * E + h * d + dd
    perm = np.empty(3 * E, dtype=np.int64)
    perm[j_new] = j_old
    return perm


def prepare_params(w_qkv, b_qkv, w_proj, b_proj, emb_dim, num_heads):
    """One-time weight preparation (hoisted out of the per-forward path):
    transpose to (in, out) layout, apply the einops column permutation, fold
    1/scaling (== 2/emb_dim, reproducing `emb_dim ** 1 / 2`) into the q
    columns, and down-cast the big matrices to bf16 for the MXU."""
    E = emb_dim
    perm = _qkv_col_perm(E, num_heads)
    inv_scale = 2.0 / E                       # exactly representable in bf16
    col_scale = np.ones(3 * E, dtype=np.float32)
    col_scale[:E] = inv_scale
    col_scale = jnp.asarray(col_scale)

    wqkv_k = (jnp.transpose(w_qkv)[:, perm] * col_scale[None, :]).astype(MXU_DTYPE)
    bqkv_k = (b_qkv[perm] * col_scale)[None, :].astype(ACC_DTYPE)     # (1, 3E)
    wproj_k = jnp.transpose(w_proj).astype(MXU_DTYPE)                 # (E, E)
    bproj_k = b_proj[None, :].astype(ACC_DTYPE)                       # (1, E)
    return wqkv_k, bqkv_k, wproj_k, bproj_k


# ----------------------------------------------------------------------------
# stage 1: fused QKV projection -> head-major bf16 q/k/v
# ----------------------------------------------------------------------------

def _qkv_proj_kernel(emb_dim, num_heads):
    E = emb_dim
    H = num_heads
    hd = E // H

    def kernel(x_ref, w_ref, b_ref, q_ref, k_ref, v_ref):
        x = x_ref[0].astype(MXU_DTYPE)                               # (TN, E)
        qkv = jnp.dot(x, w_ref[...],
                      preferred_element_type=jnp.float32) + b_ref[0]  # (TN, 3E) f32
        # One-time head-major relayout (O(N) total); q is already pre-scaled
        # by 1/scaling via the folded weight columns.
        for h in range(H):
            q_ref[0, h] = qkv[:, h * hd:(h + 1) * hd].astype(q_ref.dtype)
            k_ref[0, h] = qkv[:, E + h * hd:E + (h + 1) * hd].astype(k_ref.dtype)
            v_ref[0, h] = qkv[:, 2 * E + h * hd:2 * E + (h + 1) * hd].astype(v_ref.dtype)

    return kernel


# ----------------------------------------------------------------------------
# stage 2: flash attention (online softmax) + output projection
# ----------------------------------------------------------------------------

def _flash_attn_kernel(num_heads):
    H = num_heads

    def kernel(q_ref, k_ref, v_ref, wp_ref, bp_ref, o_ref, m_sc, l_sc, acc_sc):
        ki = pl.program_id(2)

        @pl.when(ki == 0)
        def _():
            m_sc[...] = jnp.full(m_sc.shape, -jnp.inf, dtype=m_sc.dtype)
            l_sc[...] = jnp.zeros(l_sc.shape, dtype=l_sc.dtype)
            acc_sc[...] = jnp.zeros(acc_sc.shape, dtype=acc_sc.dtype)

        q = q_ref[0]                               # (H, TQ, hd) bf16, pre-scaled
        k = k_ref[0]                               # (H, TK, hd) bf16
        v = v_ref[0]                               # (H, TK, hd) bf16

        # Head-batched MXU contraction, bf16 operands -> f32 accumulation.
        s = jnp.einsum('hqd,hkd->hqk', q, k,
                       preferred_element_type=jnp.float32)           # (H, TQ, TK)

        # Online softmax — f32 elementwise (mandatory on v5e, safe everywhere).
        m_prev = m_sc[...]
        m_new = jnp.maximum(m_prev, jnp.max(s, axis=-1, keepdims=True))
        alpha = jnp.exp(m_prev - m_new)
        p = jnp.exp(s - m_new)
        l_sc[...] = alpha * l_sc[...] + jnp.sum(p, axis=-1, keepdims=True)
        acc_sc[...] = alpha * acc_sc[...] + jnp.einsum(
            'hqk,hkd->hqd', p.astype(MXU_DTYPE), v,
            preferred_element_type=jnp.float32)
        m_sc[...] = m_new

        @pl.when(ki == pl.num_programs(2) - 1)
        def _():
            # Softmax denominator via the (otherwise idle) EUP reciprocal.
            ctx = acc_sc[...] * pl.reciprocal(l_sc[...], approx=True)   # (H, TQ, hd)
            # Lane-dense (TQ, E) slab for the projection matmul + store.
            ctx2d = jnp.concatenate([ctx[h] for h in range(H)], axis=-1)
            out = jnp.dot(ctx2d.astype(MXU_DTYPE), wp_ref[...],
                          preferred_element_type=jnp.float32) + bp_ref[0]
            o_ref[0] = out.astype(o_ref.dtype)

    return kernel


# ----------------------------------------------------------------------------
# wrapper
# ----------------------------------------------------------------------------

def multi_head_attention(x, wqkv_k, bqkv_k, wproj_k, bproj_k, num_heads,
                         *, tn_max=None, tq_max=None, tk_max=None):
    """x: (B, N, E) f32.  Weights must come from prepare_params()."""
    B, N, E = x.shape
    assert E % num_heads == 0
    H = num_heads
    hd = E // H
    out_dtype = x.dtype

    d_tn, d_tq, d_tk = _default_tiles()
    tn_max = d_tn if tn_max is None else tn_max
    tq_max = d_tq if tq_max is None else tq_max
    tk_max = d_tk if tk_max is None else tk_max

    # ----- stage 1: fused QKV projection -----
    TN = _choose_tile(N, tn_max)
    vmem1 = (4 * 2 * TN * E                   # x tile (f32, double-buffered)
             + 2 * (E * 3 * E)                # resident Wqkv (bf16, single buf)
             + 4 * 3 * E                      # qkv bias (f32)
             + 2 * 2 * 3 * TN * E             # q/k/v out tiles (bf16, double buf)
             + 4 * 2 * TN * 3 * E)            # in-kernel qkv f32 + relayout temps
    # TODO(synk): for transformer-scale E, additionally tile Wqkv over its 3E
    # output columns (extra grid axis) so weight residency stays O(E * tile).

    q, k, v = pl.pallas_call(
        _qkv_proj_kernel(E, H),
        out_shape=tuple(jax.ShapeDtypeStruct((B, H, N, hd), MXU_DTYPE)
                        for _ in range(3)),
        grid_spec=pltpu.PrefetchScalarGridSpec(
            num_scalar_prefetch=0,
            grid=(B, N // TN),
            in_specs=[
                pl.BlockSpec((1, TN, E), lambda b, n: (b, n, 0)),
                _weight_spec((E, 3 * E), lambda b, n: (0, 0)),
                _weight_spec((1, 3 * E), lambda b, n: (0, 0)),
            ],
            out_specs=tuple(
                pl.BlockSpec((1, H, TN, hd), lambda b, n: (b, 0, n, 0))
                for _ in range(3)),
        ),
        compiler_params=pltpu.CompilerParams(
            dimension_semantics=("parallel", "parallel"),
            vmem_limit_bytes=_clamp_vmem(vmem1),
        ),
    )(x, wqkv_k, bqkv_k)

    # ----- stage 2: flash attention + output projection -----
    TQ = _choose_tile(N, tq_max)
    TK = _choose_tile(N, tk_max, lane=True)    # lane dim of the score tile
    vmem2 = (2 * 2 * TQ * E                    # q tiles (bf16, double buf)
             + 2 * 2 * 2 * TK * E              # k / v tiles (bf16, double buf)
             + 2 * E * E + 4 * E               # resident Wproj (bf16) + bias
             + 4 * 2 * TQ * E                  # output tile (f32, double buf)
             + 4 * 3 * H * TQ * TK             # s / p / rescale temps (f32)
             + 4 * H * TQ * (hd + 2)           # acc / m / l scratch (f32)
             + 4 * 2 * TQ * E)                 # finalize ctx / out temps (f32)

    out = pl.pallas_call(
        _flash_attn_kernel(H),
        out_shape=jax.ShapeDtypeStruct((B, N, E), out_dtype),
        grid_spec=pltpu.PrefetchScalarGridSpec(
            num_scalar_prefetch=0,
            grid=(B, N // TQ, N // TK),
            in_specs=[
                pl.BlockSpec((1, H, TQ, hd), lambda b, qi, ki: (b, 0, qi, 0)),
                pl.BlockSpec((1, H, TK, hd), lambda b, qi, ki: (b, 0, ki, 0)),
                pl.BlockSpec((1, H, TK, hd), lambda b, qi, ki: (b, 0, ki, 0)),
                _weight_spec((E, E), lambda b, qi, ki: (0, 0)),
                _weight_spec((1, E), lambda b, qi, ki: (0, 0)),
            ],
            out_specs=pl.BlockSpec((1, TQ, E), lambda b, qi, ki: (b, qi, 0)),
            scratch_shapes=[
                pltpu.VMEM((H, TQ, 1), jnp.float32),    # running max
                pltpu.VMEM((H, TQ, 1), jnp.float32),    # running sum
                pltpu.VMEM((H, TQ, hd), jnp.float32),   # output accumulator
            ],
        ),
        compiler_params=pltpu.CompilerParams(
            # b and q-tile axes feed v7x's 2 TensorCores; the K axis is the
            # online-softmax reduction.
            dimension_semantics=("parallel", "parallel", "arbitrary"),
            vmem_limit_bytes=_clamp_vmem(vmem2),
        ),
    )(q, k, v, wproj_k, bproj_k)

    return out


# ----------------------------------------------------------------------------
# pure-JAX reference (replicates the PyTorch forward, eval mode, f32)
# ----------------------------------------------------------------------------

def _reference(x, w_qkv, b_qkv, w_proj, b_proj, num_heads):
    B, N, E = x.shape
    d = E // num_heads
    qkv = x @ w_qkv.T + b_qkv                                  # (B, N, 3E)
    qkv = qkv.reshape(B, N, num_heads, d, 3)
    qkv = jnp.transpose(qkv, (4, 0, 2, 1, 3))                  # (3, B, H, N, d)
    q, k, v = qkv[0], qkv[1], qkv[2]
    energy = jnp.einsum('bhqd,bhkd->bhqk', q, k)
    scaling = E ** 1 / 2                                       # == E / 2 (as in PyTorch)
    att = jax.nn.softmax(energy / scaling, axis=-1)
    out = jnp.einsum('bhqv,bhvd->bhqd', att, v)
    out = jnp.transpose(out, (0, 2, 1, 3)).reshape(B, N, E)
    return out @ w_proj.T + b_proj


if __name__ == "__main__":
    B, N, E, H = 2, 8, 32, 4
    key = jax.random.PRNGKey(0)
    kx, k1, k2, k3, k4 = jax.random.split(key, 5)

    x = jax.random.normal(kx, (B, N, E), dtype=jnp.float32)
    bound = 1.0 / np.sqrt(E)                      # nn.Linear-style init bounds
    w_qkv = jax.random.uniform(k1, (3 * E, E), jnp.float32, -bound, bound)
    b_qkv = jax.random.uniform(k2, (3 * E,), jnp.float32, -bound, bound)
    w_proj = jax.random.uniform(k3, (E, E), jnp.float32, -bound, bound)
    b_proj = jax.random.uniform(k4, (E,), jnp.float32, -bound, bound)

    # One-time weight prep (permutation + transpose + folded scale + bf16 cast),
    # hoisted out of the per-forward path.
    params = prepare_params(w_qkv, b_qkv, w_proj, b_proj, E, H)

    out = multi_head_attention(x, *params, num_heads=H)
    out = jax.block_until_ready(out)

    ref = _reference(x, w_qkv, b_qkv, w_proj, b_proj, H)
    assert out.shape == (B, N, E)
    # Tolerance accounts for bf16 MXU operands + pl.reciprocal(approx=True).
    np.testing.assert_allclose(np.asarray(out), np.asarray(ref),
                               atol=3e-2, rtol=3e-2)

    print("KERNEL_OK")
</pallas_src>

<mosaic_0001>
module attributes {stable_mosaic.version = 11 : i64} {
  func.func @kernel(%arg0: i32, %arg1: i32, %arg2: memref<1x8x32xf32, #tpu.memory_space<vmem>>, %arg3: memref<32x96xbf16, #tpu.memory_space<vmem>>, %arg4: memref<1x96xf32, #tpu.memory_space<vmem>>, %arg5: memref<1x4x8x8xbf16, #tpu.memory_space<vmem>>, %arg6: memref<1x4x8x8xbf16, #tpu.memory_space<vmem>>, %arg7: memref<1x4x8x8xbf16, #tpu.memory_space<vmem>>) attributes {dimension_semantics = [#tpu.dimension_semantics<parallel>, #tpu.dimension_semantics<parallel>], iteration_bounds = array<i64: 2, 1>, scalar_prefetch = 0 : i64, scratch_operands = 0 : i64, tpu.core_type = #tpu.core_type<tc>, window_params = [{transform_indices = @transform_0, window_bounds = array<i64: 1, 8, 32>}, {pipeline_mode = #tpu.pipeline_mode<synchronous>, transform_indices = @transform_1, window_bounds = array<i64: 32, 96>}, {pipeline_mode = #tpu.pipeline_mode<synchronous>, transform_indices = @transform_2, window_bounds = array<i64: 1, 96>}, {transform_indices = @transform_3, window_bounds = array<i64: 1, 4, 8, 8>}, {transform_indices = @transform_4, window_bounds = array<i64: 1, 4, 8, 8>}, {transform_indices = @transform_5, window_bounds = array<i64: 1, 4, 8, 8>}]} {
    %c0 = arith.constant 0 : index
    %c0_0 = arith.constant 0 : index
    %c0_1 = arith.constant 0 : index
    %0 = vector.load %arg2[%c0, %c0_0, %c0_1] : memref<1x8x32xf32, #tpu.memory_space<vmem>>, vector<1x8x32xf32>
    %1 = vector.shape_cast %0 : vector<1x8x32xf32> to vector<8x32xf32>
    %2 = arith.truncf %1 : vector<8x32xf32> to vector<8x32xbf16>
    %c0_2 = arith.constant 0 : index
    %c0_3 = arith.constant 0 : index
    %3 = vector.load %arg3[%c0_2, %c0_3] : memref<32x96xbf16, #tpu.memory_space<vmem>>, vector<32x96xbf16>
    %cst = arith.constant dense<0.000000e+00> : vector<8x96xf32>
    %4 = tpu.matmul %2, %3, %cst {dimension_numbers = #tpu.dot_dimension_numbers<[1], [0], [0], [1], [0, 0, 1, 1], [], []>} : vector<8x32xbf16>, vector<32x96xbf16>, vector<8x96xf32> -> vector<8x96xf32>
    %c0_4 = arith.constant 0 : index
    %c0_5 = arith.constant 0 : index
    %5 = vector.load %arg4[%c0_4, %c0_5] : memref<1x96xf32, #tpu.memory_space<vmem>>, vector<1x96xf32>
    %6 = vector.shape_cast %5 : vector<1x96xf32> to vector<96xf32>
    %7 = vector.shape_cast %6 : vector<96xf32> to vector<1x96xf32>
    %8 = vector.broadcast %7 : vector<1x96xf32> to vector<8x96xf32>
    %9 = arith.addf %4, %8 : vector<8x96xf32>
    %10 = vector.extract_strided_slice %9 {offsets = [0, 0], sizes = [8, 8], strides = [1, 1]} : vector<8x96xf32> to vector<8x8xf32>
    %11 = arith.truncf %10 : vector<8x8xf32> to vector<8x8xbf16>
    %c0_6 = arith.constant 0 : index
    %c0_7 = arith.constant 0 : index
    %c0_8 = arith.constant 0 : index
    %c0_9 = arith.constant 0 : index
    %12 = vector.load %arg5[%c0_6, %c0_7, %c0_8, %c0_9] : memref<1x4x8x8xbf16, #tpu.memory_space<vmem>>, vector<1x1x8x8xbf16>
    %13 = vector.shape_cast %12 : vector<1x1x8x8xbf16> to vector<8x8xbf16>
    %14 = vector.shape_cast %11 : vector<8x8xbf16> to vector<1x1x8x8xbf16>
    tpu.vector_store %arg5[%c0_6, %c0_7, %c0_8, %c0_9], %14 {strides = array<i32>} : memref<1x4x8x8xbf16, #tpu.memory_space<vmem>>, vector<1x1x8x8xbf16>,
    %15 = vector.extract_strided_slice %9 {offsets = [0, 32], sizes = [8, 8], strides = [1, 1]} : vector<8x96xf32> to vector<8x8xf32>
    %16 = arith.truncf %15 : vector<8x8xf32> to vector<8x8xbf16>
    %c0_10 = arith.constant 0 : index
    %c0_11 = arith.constant 0 : index
    %c0_12 = arith.constant 0 : index
    %c0_13 = arith.constant 0 : index
    %17 = vector.load %arg6[%c0_10, %c0_11, %c0_12, %c0_13] : memref<1x4x8x8xbf16, #tpu.memory_space<vmem>>, vector<1x1x8x8xbf16>
    %18 = vector.shape_cast %17 : vector<1x1x8x8xbf16> to vector<8x8xbf16>
    %19 = vector.shape_cast %16 : vector<8x8xbf16> to vector<1x1x8x8xbf16>
    tpu.vector_store %arg6[%c0_10, %c0_11, %c0_12, %c0_13], %19 {strides = array<i32>} : memref<1x4x8x8xbf16, #tpu.memory_space<vmem>>, vector<1x1x8x8xbf16>,
    %20 = vector.extract_strided_slice %9 {offsets = [0, 64], sizes = [8, 8], strides = [1, 1]} : vector<8x96xf32> to vector<8x8xf32>
    %21 = arith.truncf %20 : vector<8x8xf32> to vector<8x8xbf16>
    %c0_14 = arith.constant 0 : index
    %c0_15 = arith.constant 0 : index
    %c0_16 = arith.constant 0 : index
    %c0_17 = arith.constant 0 : index
    %22 = vector.load %arg7[%c0_14, %c0_15, %c0_16, %c0_17] : memref<1x4x8x8xbf16, #tpu.memory_space<vmem>>, vector<1x1x8x8xbf16>
    %23 = vector.shape_cast %22 : vector<1x1x8x8xbf16> to vector<8x8xbf16>
    %24 = vector.shape_cast %21 : vector<8x8xbf16> to vector<1x1x8x8xbf16>
    tpu.vector_store %arg7[%c0_14, %c0_15, %c0_16, %c0_17], %24 {strides = array<i32>} : memref<1x4x8x8xbf16, #tpu.memory_space<vmem>>, vector<1x1x8x8xbf16>,
    %25 = vector.extract_strided_slice %9 {offsets = [0, 8], sizes = [8, 8], strides = [1, 1]} : vector<8x96xf32> to vector<8x8xf32>
    %26 = arith.truncf %25 : vector<8x8xf32> to vector<8x8xbf16>
    %c0_18 = arith.constant 0 : index
    %c1 = arith.constant 1 : index
    %c0_19 = arith.constant 0 : index
    %c0_20 = arith.constant 0 : index
    %27 = vector.load %arg5[%c0_18, %c1, %c0_19, %c0_20] : memref<1x4x8x8xbf16, #tpu.memory_space<vmem>>, vector<1x1x8x8xbf16>
    %28 = vector.shape_cast %27 : vector<1x1x8x8xbf16> to vector<8x8xbf16>
    %29 = vector.shape_cast %26 : vector<8x8xbf16> to vector<1x1x8x8xbf16>
    tpu.vector_store %arg5[%c0_18, %c1, %c0_19, %c0_20], %29 {strides = array<i32>} : memref<1x4x8x8xbf16, #tpu.memory_space<vmem>>, vector<1x1x8x8xbf16>,
    %30 = vector.extract_strided_slice %9 {offsets = [0, 40], sizes = [8, 8], strides = [1, 1]} : vector<8x96xf32> to vector<8x8xf32>
    %31 = arith.truncf %30 : vector<8x8xf32> to vector<8x8xbf16>
    %c0_21 = arith.constant 0 : index
    %c1_22 = arith.constant 1 : index
    %c0_23 = arith.constant 0 : index
    %c0_24 = arith.constant 0 : index
    %32 = vector.load %arg6[%c0_21, %c1_22, %c0_23, %c0_24] : memref<1x4x8x8xbf16, #tpu.memory_space<vmem>>, vector<1x1x8x8xbf16>
    %33 = vector.shape_cast %32 : vector<1x1x8x8xbf16> to vector<8x8xbf16>
    %34 = vector.shape_cast %31 : vector<8x8xbf16> to vector<1x1x8x8xbf16>
    tpu.vector_store %arg6[%c0_21, %c1_22, %c0_23, %c0_24], %34 {strides = array<i32>} : memref<1x4x8x8xbf16, #tpu.memory_space<vmem>>, vector<1x1x8x8xbf16>,
    %35 = vector.extract_strided_slice %9 {offsets = [0, 72], sizes = [8, 8], strides = [1, 1]} : vector<8x96xf32> to vector<8x8xf32>
    %36 = arith.truncf %35 : vector<8x8xf32> to vector<8x8xbf16>
    %c0_25 = arith.constant 0 : index
    %c1_26 = arith.constant 1 : index
    %c0_27 = arith.constant 0 : index
    %c0_28 = arith.constant 0 : index
    %37 = vector.load %arg7[%c0_25, %c1_26, %c0_27, %c0_28] : memref<1x4x8x8xbf16, #tpu.memory_space<vmem>>, vector<1x1x8x8xbf16>
    %38 = vector.shape_cast %37 : vector<1x1x8x8xbf16> to vector<8x8xbf16>
    %39 = vector.shape_cast %36 : vector<8x8xbf16> to vector<1x1x8x8xbf16>
    tpu.vector_store %arg7[%c0_25, %c1_26, %c0_27, %c0_28], %39 {strides = array<i32>} : memref<1x4x8x8xbf16, #tpu.memory_space<vmem>>, vector<1x1x8x8xbf16>,
    %40 = vector.extract_strided_slice %9 {offsets = [0, 16], sizes = [8, 8], strides = [1, 1]} : vector<8x96xf32> to vector<8x8xf32>
    %41 = arith.truncf %40 : vector<8x8xf32> to vector<8x8xbf16>
    %c0_29 = arith.constant 0 : index
    %c2 = arith.constant 2 : index
    %c0_30 = arith.constant 0 : index
    %c0_31 = arith.constant 0 : index
    %42 = vector.load %arg5[%c0_29, %c2, %c0_30, %c0_31] : memref<1x4x8x8xbf16, #tpu.memory_space<vmem>>, vector<1x1x8x8xbf16>
    %43 = vector.shape_cast %42 : vector<1x1x8x8xbf16> to vector<8x8xbf16>
    %44 = vector.shape_cast %41 : vector<8x8xbf16> to vector<1x1x8x8xbf16>
    tpu.vector_store %arg5[%c0_29, %c2, %c0_30, %c0_31], %44 {strides = array<i32>} : memref<1x4x8x8xbf16, #tpu.memory_space<vmem>>, vector<1x1x8x8xbf16>,
    %45 = vector.extract_strided_slice %9 {offsets = [0, 48], sizes = [8, 8], strides = [1, 1]} : vector<8x96xf32> to vector<8x8xf32>
    %46 = arith.truncf %45 : vector<8x8xf32> to vector<8x8xbf16>
    %c0_32 = arith.constant 0 : index
    %c2_33 = arith.constant 2 : index
    %c0_34 = arith.constant 0 : index
    %c0_35 = arith.constant 0 : index
    %47 = vector.load %arg6[%c0_32, %c2_33, %c0_34, %c0_35] : memref<1x4x8x8xbf16, #tpu.memory_space<vmem>>, vector<1x1x8x8xbf16>
    %48 = vector.shape_cast %47 : vector<1x1x8x8xbf16> to vector<8x8xbf16>
    %49 = vector.shape_cast %46 : vector<8x8xbf16> to vector<1x1x8x8xbf16>
    tpu.vector_store %arg6[%c0_32, %c2_33, %c0_34, %c0_35], %49 {strides = array<i32>} : memref<1x4x8x8xbf16, #tpu.memory_space<vmem>>, vector<1x1x8x8xbf16>,
    %50 = vector.extract_strided_slice %9 {offsets = [0, 80], sizes = [8, 8], strides = [1, 1]} : vector<8x96xf32> to vector<8x8xf32>
    %51 = arith.truncf %50 : vector<8x8xf32> to vector<8x8xbf16>
    %c0_36 = arith.constant 0 : index
    %c2_37 = arith.constant 2 : index
    %c0_38 = arith.constant 0 : index
    %c0_39 = arith.constant 0 : index
    %52 = vector.load %arg7[%c0_36, %c2_37, %c0_38, %c0_39] : memref<1x4x8x8xbf16, #tpu.memory_space<vmem>>, vector<1x1x8x8xbf16>
    %53 = vector.shape_cast %52 : vector<1x1x8x8xbf16> to vector<8x8xbf16>
    %54 = vector.shape_cast %51 : vector<8x8xbf16> to vector<1x1x8x8xbf16>
    tpu.vector_store %arg7[%c0_36, %c2_37, %c0_38, %c0_39], %54 {strides = array<i32>} : memref<1x4x8x8xbf16, #tpu.memory_space<vmem>>, vector<1x1x8x8xbf16>,
    %55 = vector.extract_strided_slice %9 {offsets = [0, 24], sizes = [8, 8], strides = [1, 1]} : vector<8x96xf32> to vector<8x8xf32>
    %56 = arith.truncf %55 : vector<8x8xf32> to vector<8x8xbf16>
    %c0_40 = arith.constant 0 : index
    %c3 = arith.constant 3 : index
    %c0_41 = arith.constant 0 : index
    %c0_42 = arith.constant 0 : index
    %57 = vector.load %arg5[%c0_40, %c3, %c0_41, %c0_42] : memref<1x4x8x8xbf16, #tpu.memory_space<vmem>>, vector<1x1x8x8xbf16>
    %58 = vector.shape_cast %57 : vector<1x1x8x8xbf16> to vector<8x8xbf16>
    %59 = vector.shape_cast %56 : vector<8x8xbf16> to vector<1x1x8x8xbf16>
    tpu.vector_store %arg5[%c0_40, %c3, %c0_41, %c0_42], %59 {strides = array<i32>} : memref<1x4x8x8xbf16, #tpu.memory_space<vmem>>, vector<1x1x8x8xbf16>,
    %60 = vector.extract_strided_slice %9 {offsets = [0, 56], sizes = [8, 8], strides = [1, 1]} : vector<8x96xf32> to vector<8x8xf32>
    %61 = arith.truncf %60 : vector<8x8xf32> to vector<8x8xbf16>
    %c0_43 = arith.constant 0 : index
    %c3_44 = arith.constant 3 : index
    %c0_45 = arith.constant 0 : index
    %c0_46 = arith.constant 0 : index
    %62 = vector.load %arg6[%c0_43, %c3_44, %c0_45, %c0_46] : memref<1x4x8x8xbf16, #tpu.memory_space<vmem>>, vector<1x1x8x8xbf16>
    %63 = vector.shape_cast %62 : vector<1x1x8x8xbf16> to vector<8x8xbf16>
    %64 = vector.shape_cast %61 : vector<8x8xbf16> to vector<1x1x8x8xbf16>
    tpu.vector_store %arg6[%c0_43, %c3_44, %c0_45, %c0_46], %64 {strides = array<i32>} : memref<1x4x8x8xbf16, #tpu.memory_space<vmem>>, vector<1x1x8x8xbf16>,
    %65 = vector.extract_strided_slice %9 {offsets = [0, 88], sizes = [8, 8], strides = [1, 1]} : vector<8x96xf32> to vector<8x8xf32>
    %66 = arith.truncf %65 : vector<8x8xf32> to vector<8x8xbf16>
    %c0_47 = arith.constant 0 : index
    %c3_48 = arith.constant 3 : index
    %c0_49 = arith.constant 0 : index
    %c0_50 = arith.constant 0 : index
    %67 = vector.load %arg7[%c0_47, %c3_48, %c0_49, %c0_50] : memref<1x4x8x8xbf16, #tpu.memory_space<vmem>>, vector<1x1x8x8xbf16>
    %68 = vector.shape_cast %67 : vector<1x1x8x8xbf16> to vector<8x8xbf16>
    %69 = vector.shape_cast %66 : vector<8x8xbf16> to vector<1x1x8x8xbf16>
    tpu.vector_store %arg7[%c0_47, %c3_48, %c0_49, %c0_50], %69 {strides = array<i32>} : memref<1x4x8x8xbf16, #tpu.memory_space<vmem>>, vector<1x1x8x8xbf16>,
    return
  }
  func.func @transform_0(%arg0: i32, %arg1: i32) -> (i32, i32, i32) {
    %c0_i32 = arith.constant 0 : i32
    %c0_i32_0 = arith.constant 0 : i32
    return %arg0, %arg1, %c0_i32 : i32, i32, i32
  }
  func.func @transform_1(%arg0: i32, %arg1: i32) -> (i32, i32) {
    %c0_i32 = arith.constant 0 : i32
    %c0_i32_0 = arith.constant 0 : i32
    %c0_i32_1 = arith.constant 0 : i32
    return %c0_i32, %c0_i32_0 : i32, i32
  }
  func.func @transform_2(%arg0: i32, %arg1: i32) -> (i32, i32) {
    %c0_i32 = arith.constant 0 : i32
    %c0_i32_0 = arith.constant 0 : i32
    %c0_i32_1 = arith.constant 0 : i32
    return %c0_i32, %c0_i32_0 : i32, i32
  }
  func.func @transform_3(%arg0: i32, %arg1: i32) -> (i32, i32, i32, i32) {
    %c0_i32 = arith.constant 0 : i32
    %c0_i32_0 = arith.constant 0 : i32
    %c0_i32_1 = arith.constant 0 : i32
    return %arg0, %c0_i32, %arg1, %c0_i32_0 : i32, i32, i32, i32
  }
  func.func @transform_4(%arg0: i32, %arg1: i32) -> (i32, i32, i32, i32) {
    %c0_i32 = arith.constant 0 : i32
    %c0_i32_0 = arith.constant 0 : i32
    %c0_i32_1 = arith.constant 0 : i32
    return %arg0, %c0_i32, %arg1, %c0_i32_0 : i32, i32, i32, i32
  }
  func.func @transform_5(%arg0: i32, %arg1: i32) -> (i32, i32, i32, i32) {
    %c0_i32 = arith.constant 0 : i32
    %c0_i32_0 = arith.constant 0 : i32
    %c0_i32_1 = arith.constant 0 : i32
    return %arg0, %c0_i32, %arg1, %c0_i32_0 : i32, i32, i32, i32
  }
}

</mosaic_0001>

<llo_original>
// kernel: tpu_custom_call.1
$region0: #{tpu_custom_call.1}
  #allocation0 [shape = 'u32[]', space=smem, size = 0x4, offset = 0x4, fixed_abs, tag = 'smem constant byte address 0x4 - core index']
  #allocation1 [shape = 'u32[144,128]{1,0:T(1,128)}', space=vmem, size = 0x12000, scoped, tag = 'internal scratch']
  %s0 = inlined_call_operand.hbm [shape: f32[2,8,32], index: 0, kind: input, shape index: {}]
  %s1 = inlined_call_operand.hbm [shape: bf16[32,96], index: 1, kind: input, shape index: {}]
  %s2 = inlined_call_operand.vmem [shape: f32[1,96], index: 2, kind: input, shape index: {}]
  %s3 = inlined_call_operand.hbm [shape: bf16[2,4,8,8], index: 3, kind: output, shape index: {0}]
  %s4 = inlined_call_operand.hbm [shape: bf16[2,4,8,8], index: 4, kind: output, shape index: {1}]
  %s5 = inlined_call_operand.hbm [shape: bf16[2,4,8,8], index: 5, kind: output, shape index: {2}]
  %6 = xla_tuple %s3, %s4, %s5
  %s7 = sld [smem:[#allocation0]]
  $region69: #{tpu_custom_call.1} parent=0
    _
  %s9 = ssub.s32 1, %s7
  %s10 = scalar_select 0, %s9, %s7
  $region1: #{tpu_custom_call.1} parent=0
    #allocation2 [shape = 'u8[8192]{0}', space=vmem, size = 0x2000, scoped, tag = 'input window, operand 0']
    #allocation3 [shape = 's32[2]{0}', space=sflag, size = 0x8, scoped, tag = 'scoped memory for tpu_custom_call.1']
    #allocation4 [shape = 's32[2]{0}', space=sflag, size = 0x8, scoped, tag = 'scoped memory for tpu_custom_call.1']
    #allocation5 [shape = 'u8[8192]{0}', space=vmem, size = 0x2000, scoped, tag = 'input window, operand 1, single buffered']
    #allocation6 [shape = 's32[1]{0}', space=sflag, size = 0x4, scoped, tag = 'scoped memory for tpu_custom_call.1']
    #allocation7 [shape = 'u8[16384]{0}', space=vmem, size = 0x4000, scoped, tag = 'output window, operand 0']
    #allocation8 [shape = 'u8[16384]{0}', space=vmem, size = 0x4000, scoped, tag = 'output window, operand 1']
    #allocation9 [shape = 's32[2]{0}', space=sflag, size = 0x8, scoped, tag = 'scoped memory for tpu_custom_call.1']
    #allocation10 [shape = 'u8[16384]{0}', space=vmem, size = 0x4000, scoped, tag = 'output window, operand 2']
    %11 = vsyncpa [#allocation3], 0
    %s12 = scalar_lea.sflag [#allocation3], 1
    %13 = vsyncpa %s12, 0
    %14 = vsyncpa [#allocation6], 0
    %15 = vsyncpa [#allocation4], 0
    %s16 = scalar_lea.sflag [#allocation4], 1
    %17 = vsyncpa %s16, 0
    %18 = vsyncpa [#allocation9], 0
    %s19 = scalar_lea.sflag [#allocation9], 1
    %20 = vsyncpa %s19, 0
    loop: start=0, step=1, limit=4
    $region2: #{tpu_custom_call.1} parent=1 // loop_pre_header
      _
    $region3: #{tpu_custom_call.1} parent=1 // loop_header
      %s22 = sphi 0, %s26
      %p23 = scmp.ge.s32.totalorder %s22, 4
      %s29 = sphi 0, %s41
      %s30 = sphi 0, %s37
      %s31 = sphi 0, %s29
      %s32 = sphi 0, %s30
      %s33 = sphi 0, %s31
      %s34 = sphi 0, %s32
      %s46 = sphi 0, %s48
      %s49 = sphi 0, %s46
      %s50 = sphi 0, %s49
      %s66 = sphi 0, %s50
      %s70 = sphi 0, %s70
      %s72 = sphi 0, %s70
      %s73 = sphi 0, %s72
      %s87 = sphi 0, %s73
      %s91 = sphi 0, %s91
      %s93 = sphi 0, %s91
      %s94 = sphi 0, %s93
      %s108 = sphi 0, %s94
      %s116 = sphi 0, %s118
      %s119 = sphi 0, %s116
      %s120 = sphi 0, %s119
      %s136 = sphi 0, %s120
      %s144 = sphi 0, %s146
      %s147 = sphi 0, %s144
      %s148 = sphi 0, %s147
      %s164 = sphi 0, %s148
      %s172 = sphi 0, %s174
      %s175 = sphi 0, %s172
      %s176 = sphi 0, %s175
      %s192 = sphi 0, %s176
    $region4: #{tpu_custom_call.1} parent=1 // loop_header_branch
      %25 = sbr.rel (%p23) target = $region8
    $region5: #{tpu_custom_call.1} parent=1 // loop_body
      %s27 = ssub.s32 %s22, 1
      %s28 = ssub.s32 %s22, 2
      %s35 = sadd.s32 1, %s30
      %p36 = scmp.ge.s32.totalorder %s35, 1
      %s37 = scalar_select %p36, 0, %s35
      %s38 = sadd.s32 1, %s29
      %s39 = scalar_select %p36, %s38, %s29
      %p40 = scmp.ge.s32.totalorder %s39, 2
      %s41 = scalar_select %p40, 0, %s39
      %s42 = ssub.s32 %s29, %s41
      %s43 = ssub.s32 %s30, %s37
      %s44 = sor.u32 %s42, %s43
      %p45 = scmp.eq.s32.totalorder %s44, 0
      %s47 = sadd.s32 %s46, 1
      %s48 = scalar_select %p45, %s46, %s47
      %p51 = pneg %p45
      %p52 = scmp.eq.s32.totalorder %s22, 1
      %p53 = por %p51, %p52
      %p54 = scmp.ne.s32.totalorder %s46, %s49
      %p55 = scmp.eq.s32.totalorder %s22, 0
      %p56 = por %p54, %p55
      %p57 = scmp.ne.s32.totalorder %s46, %s49
      %p58 = scmp.eq.s32.totalorder %s27, 1
      %p59 = por %p57, %p58
      %p60 = scmp.ne.s32.totalorder %s49, %s50
      %p61 = scmp.eq.s32.totalorder %s27, 0
      %p62 = por %p60, %p61
      %p63 = scmp.ne.s32.totalorder %s49, %s50
      %p64 = scmp.eq.s32.totalorder %s28, 1
      %p65 = por %p63, %p64
      %p67 = scmp.ne.s32.totalorder %s50, %s66
      %p68 = scmp.eq.s32.totalorder %s28, 0
      %p69 = por %p67, %p68
      %s71 = sadd.s32 %s70, 1
      %p74 = scmp.eq.s32.totalorder %s22, 1
      %p75 = scmp.ne.s32.totalorder %s70, %s72
      %p76 = scmp.eq.s32.totalorder %s22, 0
      %p77 = por %p75, %p76
      %p78 = scmp.ne.s32.totalorder %s70, %s72
      %p79 = scmp.eq.s32.totalorder %s27, 1
      %p80 = por %p78, %p79
      %p81 = scmp.ne.s32.totalorder %s72, %s73
      %p82 = scmp.eq.s32.totalorder %s27, 0
      %p83 = por %p81, %p82
      %p84 = scmp.ne.s32.totalorder %s72, %s73
      %p85 = scmp.eq.s32.totalorder %s28, 1
      %p86 = por %p84, %p85
      %p88 = scmp.ne.s32.totalorder %s73, %s87
      %p89 = scmp.eq.s32.totalorder %s28, 0
      %p90 = por %p88, %p89
      %s92 = sadd.s32 %s91, 1
      %p95 = scmp.eq.s32.totalorder %s22, 1
      %p96 = scmp.ne.s32.totalorder %s91, %s93
      %p97 = scmp.eq.s32.totalorder %s22, 0
      %p98 = por %p96, %p97
      %p99 = scmp.ne.s32.totalorder %s91, %s93
      %p100 = scmp.eq.s32.totalorder %s27, 1
      %p101 = por %p99, %p100
      %p102 = scmp.ne.s32.totalorder %s93, %s94
      %p103 = scmp.eq.s32.totalorder %s27, 0
      %p104 = por %p102, %p103
      %p105 = scmp.ne.s32.totalorder %s93, %s94
      %p106 = scmp.eq.s32.totalorder %s28, 1
      %p107 = por %p105, %p106
      %p109 = scmp.ne.s32.totalorder %s94, %s108
      %p110 = scmp.eq.s32.totalorder %s28, 0
      %p111 = por %p109, %p110
      %s112 = ssub.s32 %s29, %s41
      %s113 = ssub.s32 %s30, %s37
      %s114 = sor.u32 %s112, %s113
      %p115 = scmp.eq.s32.totalorder %s114, 0
      %s117 = sadd.s32 %s116, 1
      %s118 = scalar_select %p115, %s116, %s117
      %p121 = pneg %p115
      %p122 = scmp.eq.s32.totalorder %s22, 1
      %p123 = por %p121, %p122
      %p124 = scmp.ne.s32.totalorder %s116, %s119
      %p125 = scmp.eq.s32.totalorder %s22, 0
      %p126 = por %p124, %p125
      %p127 = scmp.ne.s32.totalorder %s116, %s119
      %p128 = scmp.eq.s32.totalorder %s27, 1
      %p129 = por %p127, %p128
      %p130 = scmp.ne.s32.totalorder %s119, %s120
      %p131 = scmp.eq.s32.totalorder %s27, 0
      %p132 = por %p130, %p131
      %p133 = scmp.ne.s32.totalorder %s119, %s120
      %p134 = scmp.eq.s32.totalorder %s28, 1
      %p135 = por %p133, %p134
      %p137 = scmp.ne.s32.totalorder %s120, %s136
      %p138 = scmp.eq.s32.totalorder %s28, 0
      %p139 = por %p137, %p138
      %s140 = ssub.s32 %s29, %s41
      %s141 = ssub.s32 %s30, %s37
      %s142 = sor.u32 %s140, %s141
      %p143 = scmp.eq.s32.totalorder %s142, 0
      %s145 = sadd.s32 %s144, 1
      %s146 = scalar_select %p143, %s144, %s145
      %p149 = pneg %p143
      %p150 = scmp.eq.s32.totalorder %s22, 1
      %p151 = por %p149, %p150
      %p152 = scmp.ne.s32.totalorder %s144, %s147
      %p153 = scmp.eq.s32.totalorder %s22, 0
      %p154 = por %p152, %p153
      %p155 = scmp.ne.s32.totalorder %s144, %s147
      %p156 = scmp.eq.s32.totalorder %s27, 1
      %p157 = por %p155, %p156
      %p158 = scmp.ne.s32.totalorder %s147, %s148
      %p159 = scmp.eq.s32.totalorder %s27, 0
      %p160 = por %p158, %p159
      %p161 = scmp.ne.s32.totalorder %s147, %s148
      %p162 = scmp.eq.s32.totalorder %s28, 1
      %p163 = por %p161, %p162
      %p165 = scmp.ne.s32.totalorder %s148, %s164
      %p166 = scmp.eq.s32.totalorder %s28, 0
      %p167 = por %p165, %p166
      %s168 = ssub.s32 %s29, %s41
      %s169 = ssub.s32 %s30, %s37
      %s170 = sor.u32 %s168, %s169
      %p171 = scmp.eq.s32.totalorder %s170, 0
      %s173 = sadd.s32 %s172, 1
      %s174 = scalar_select %p171, %s172, %s173
      %p177 = pneg %p171
      %p178 = scmp.eq.s32.totalorder %s22, 1
      %p179 = por %p177, %p178
      %p180 = scmp.ne.s32.totalorder %s172, %s175
      %p181 = scmp.eq.s32.totalorder %s22, 0
      %p182 = por %p180, %p181
      %p183 = scmp.ne.s32.totalorder %s172, %s175
      %p184 = scmp.eq.s32.totalorder %s27, 1
      %p185 = por %p183, %p184
      %p186 = scmp.ne.s32.totalorder %s175, %s176
      %p187 = scmp.eq.s32.totalorder %s27, 0
      %p188 = por %p186, %p187
      %p189 = scmp.ne.s32.totalorder %s175, %s176
      %p190 = scmp.eq.s32.totalorder %s28, 1
      %p191 = por %p189, %p190
      %p193 = scmp.ne.s32.totalorder %s176, %s192
      %p194 = scmp.eq.s32.totalorder %s28, 0
      %p195 = por %p193, %p194
      %p196 = scmp.le.s32.totalorder 1, %s22
      %p197 = scmp.lt.s32.totalorder %s22, 3
      %p198 = pnand %p196, %p197
      %p199 = pneg %p198
      // Predicated region
      $region9: #{tpu_custom_call.1} parent=5 // pred_check
        _
      $region10: #{tpu_custom_call.1} parent=5 // pred_check_branch
        %201 = sbr.rel (%p198) target = $region12
      $region11: #{tpu_custom_call.1} parent=5 // pred_region
        %s202 = ssub.s32 %s22, 1
        // Predicated region
        $region13: #{tpu_custom_call.1} parent=11 // pred_check
          %p203 = pneg %p83
        $region14: #{tpu_custom_call.1} parent=11 // pred_check_branch
          %205 = sbr.rel (%p203) target = $region16
        $region15: #{tpu_custom_call.1} parent=11 // pred_region
          %s207 = ssub.s32 256, 256
          %208 = vsyncadd [#allocation6], %s207
          %s209 = sshll.u32 [#allocation5], 4
          %s210 = int_to_ptr.vmem [resolvable:$true] %s209
          %215 = dma.hbm_to_vmem [thread:$0]  %s1, 256, %s210, [#allocation6], 64, 64, 4
        $region16: #{tpu_custom_call.1} parent=11 // pred_fallthru
          _
        // Predicated region
        $region17: #{tpu_custom_call.1} parent=11 // pred_check
          %p216 = pneg %p104
        $region18: #{tpu_custom_call.1} parent=11 // pred_check_branch
          %218 = sbr.rel (%p216) target = $region20
        $region19: #{tpu_custom_call.1} parent=11 // pred_region
          _
        $region20: #{tpu_custom_call.1} parent=11 // pred_fallthru
          _
      $region12: #{tpu_custom_call.1} parent=5 // pred_fallthru
        _
      %p219 = scmp.lt.s32.totalorder %s22, 2
      // Predicated region
      $region21: #{tpu_custom_call.1} parent=5 // pred_check
        %p220 = pneg %p219
      $region22: #{tpu_custom_call.1} parent=5 // pred_check_branch
        %222 = sbr.rel (%p220) target = $region24
      $region23: #{tpu_custom_call.1} parent=5 // pred_region
        // Predicated region
        $region25: #{tpu_custom_call.1} parent=23 // pred_check
          %p223 = pneg %p56
        $region26: #{tpu_custom_call.1} parent=23 // pred_check_branch
          %225 = sbr.rel (%p223) target = $region28
        $region27: #{tpu_custom_call.1} parent=23 // pred_region
          %s226 = sand.u32 %s46, 1
          %s227 = scalar_lea.sflag [#allocation3], %s226
          %s228 = sand.u32 %s46, 1
          %s229 = smul.addr %s228, 8
          %s230 = scalar_lea.vmem [#allocation2], %s229
          %s232 = ssub.s32 128, 128
          %233 = vsyncadd %s227, %s232
          %s234 = sadd.s32 %s30, %s29
          %s235 = smul.addr %s234, 128
          %s236 = scalar_lea.hbm %s0, %s235
          %s238 = sshll.u32 %s230, 4
          %s239 = int_to_ptr.vmem [resolvable:$true] %s238
          %241 = dma.hbm_to_vmem [thread:$0]  %s236, 128, %s239, %s227
        $region28: #{tpu_custom_call.1} parent=23 // pred_fallthru
          _
      $region24: #{tpu_custom_call.1} parent=5 // pred_fallthru
        _
      %p242 = scmp.le.s32.totalorder 1, %s22
      %p243 = scmp.lt.s32.totalorder %s22, 3
      %p244 = pnand %p242, %p243
      %p245 = pneg %p244
      // Predicated region
      $region29: #{tpu_custom_call.1} parent=5 // pred_check
        _
      $region30: #{tpu_custom_call.1} parent=5 // pred_check_branch
        %247 = sbr.rel (%p244) target = $region32
      $region31: #{tpu_custom_call.1} parent=5 // pred_region
        %s248 = ssub.s32 %s22, 1
        %s249 = sand.u32 %s49, 1
        %s250 = scalar_lea.sflag [#allocation3], %s249
        %s251 = sand.u32 %s49, 1
        %s252 = smul.addr %s251, 8
        %s253 = scalar_lea.vmem [#allocation2], %s252
        // Predicated region
        $region33: #{tpu_custom_call.1} parent=31 // pred_check
          %p254 = pneg %p62
        $region34: #{tpu_custom_call.1} parent=31 // pred_check_branch
          %256 = sbr.rel (%p254) target = $region36
        $region35: #{tpu_custom_call.1} parent=31 // pred_region
          %257 = dma.done %s250, 128
        $region36: #{tpu_custom_call.1} parent=31 // pred_fallthru
          _
        // Predicated region
        $region37: #{tpu_custom_call.1} parent=31 // pred_check
          %p258 = pneg %p83
        $region38: #{tpu_custom_call.1} parent=31 // pred_check_branch
          %260 = sbr.rel (%p258) target = $region40
        $region39: #{tpu_custom_call.1} parent=31 // pred_region
          %261 = dma.done [#allocation6], 256
        $region40: #{tpu_custom_call.1} parent=31 // pred_fallthru
          _
        %s262 = sand.u32 %s49, 1
        %s263 = scalar_lea.sflag [#allocation3], %s262
        %s264 = sand.u32 %s49, 1
        %s265 = smul.addr %s264, 8
        %s266 = scalar_lea.vmem [#allocation2], %s265
        %p267 = pneg %p62
        %p268 = pneg %p59
        %p269 = pneg %p83
        %p270 = pneg %p80
        %p271 = pneg %p104
        %p272 = pneg %p101
        %p273 = pneg %p132
        %p274 = pneg %p129
        %s275 = sand.u32 %s119, 1
        %s276 = scalar_lea.sflag [#allocation4], %s275
        %s277 = sand.u32 %s119, 1
        %s278 = smul.addr %s277, 16
        %s279 = scalar_lea.vmem [#allocation7], %s278
        %p280 = pneg %p160
        %p281 = pneg %p157
        %s282 = sand.u32 %s27, 1
        %s283 = scalar_lea.sflag [#allocation9], %s282
        %s284 = sand.u32 %s147, 1
        %s285 = smul.addr %s284, 16
        %s286 = scalar_lea.vmem [#allocation8], %s285
        %p287 = pneg %p188
        %p288 = pneg %p185
        %s289 = sand.u32 %s27, 1
        %s290 = scalar_lea.sflag [#allocation9], %s289
        %s291 = sand.u32 %s175, 1
        %s292 = smul.addr %s291, 16
        %s293 = scalar_lea.vmem [#allocation10], %s292
        %v295 = vld [vmem:[%s253] sm:$0xff]
        %v296 = vpack.c.bf16 %v295, %v295
        %v297 = vld [vmem:[#allocation5] sm:$0xf]
        %v298 = vld [vmem:[#allocation5 + $0x4] sm:$0xf]
        %v299 = vld [vmem:[#allocation5 + $0x8] sm:$0xf]
        %v300 = vld [vmem:[#allocation5 + $0xc] sm:$0xf]
        %v301 = vld [vmem:[%s2] sm:$0x1]
        %v303 = vlaneseq
        %v304 = vshrl.u32 %v303, 7
        %v305 = vsub.s32 0, %v304
        %v306 = vrot.slane %v301, %v305
        %v312 = vunpack.c.l.b16 %v297
        %v313 = vunpack.c.l.b16 %v298
        %v314 = vunpack.c.l.b16 %v299
        %v315 = vunpack.c.l.b16 %v300
        %v316 = vpack.c.b16 %v313, %v312
        %v317 = vpack.c.b16 %v315, %v314
        %vm320 = vcmask 261120
        %v322 = vsel %vm320, %v296, 0
        %324 = vmatprep.subr.bf16.mxu0 0
        %325 = vmatpush1.bf16.msra.mxu0 %v316
        %326 = vmatprep.subr.bf16.mxu0 0
        %327 = vmatpush1.bf16.msra.mxu0 %v317
        %328 = vmatprep.subr.bf16.mxu0 0
        %329 = vmatpush1.bf16.msra.mxu0 0
        %330 = vmatprep.subr.bf16.mxu0 0
        %331 = vmatpush1.bf16.msra.mxu0 0
        %332 = vmatprep.subr.bf16.mxu0 0
        %333 = vmatpush1.bf16.msra.mxu0 0
        %334 = vmatprep.subr.bf16.mxu0 0
        %335 = vmatpush1.bf16.msra.mxu0 0
        %336 = vmatprep.subr.bf16.mxu0 0
        %337 = vmatpush1.bf16.msra.mxu0 0
        %338 = vmatprep.subr.bf16.mxu0 0
        %339 = vmatpush1.bf16.msra.mxu0 0
        %340 = vmatprep.subr.bf16.mxu0 0
        %341 = vmatpush1.bf16.msra.mxu0 0
        %342 = vmatprep.subr.bf16.mxu0 0
        %343 = vmatpush1.bf16.msra.mxu0 0
        %344 = vmatprep.subr.bf16.mxu0 0
        %345 = vmatpush1.bf16.msra.mxu0 0
        %346 = vmatprep.subr.bf16.mxu0 0
        %347 = vmatpush1.bf16.msra.mxu0 0
        %348 = vmatprep.subr.bf16.mxu0 0
        %349 = vmatpush1.bf16.msra.mxu0 0
        %350 = vmatprep.subr.bf16.mxu0 0
        %351 = vmatpush1.bf16.msra.mxu0 0
        %352 = vmatprep.subr.bf16.mxu0 0
        %353 = vmatpush1.bf16.msra.mxu0 0
        %354 = vmatprep.subr.bf16.mxu0 0
        %355 = vmatpush1.bf16.msra.mxu0 0
        %356 = vmatprep.mubr.bf16.mxu0 0
        %357 = vmatmul.mubr.bf16.gmra.mrb[0].mxu0 %v322
        %v358 = vpop.f32.mrb[0].mxu0
        %v359 = vadd.f32 %v306, %v358
        %v360 = vpop.f32.mrb[0].mxu0
        %v361 = vpop.f32.mrb[0].mxu0
        %v362 = vpop.f32.mrb[0].mxu0
        %363 = vdwg.mxu0
        %v364 = vpack.c.bf16 %v359, %v359
        %vm365 = vcmask 60416
        %366 = vst.msk [vmem:[%s279] sm:$0xf] %vm365, %v364
        %v368 = vunpack.c.l.b16 %v364
        %v369 = vpack.c.b16 %v368, %v368
        %370 = vrot.lane.b32.xlu0 %v369, 96
        %v371 = vpop.permute.xlu0 %370
        %373 = vst.msk [vmem:[%s286] sm:$0xf] %vm365, %v371
        %374 = vrot.lane.b32.xlu0 %v369, 64
        %v375 = vpop.permute.xlu0 %374
        %377 = vst.msk [vmem:[%s293] sm:$0xf] %vm365, %v375
        %378 = vrot.lane.b32.xlu0 %v369, 120
        %v379 = vpop.permute.xlu0 %378
        %s381 = scalar_lea.vmem %s279, 4 [#allocation7]
        %382 = vst.msk [vmem:[%s381] sm:$0xf] %vm365, %v379
        %383 = vrot.lane.b32.xlu0 %v369, 88
        %v384 = vpop.permute.xlu0 %383
        %s386 = scalar_lea.vmem %s286, 4 [#allocation8]
        %387 = vst.msk [vmem:[%s386] sm:$0xf] %vm365, %v384
        %388 = vrot.lane.b32.xlu0 %v369, 56
        %v389 = vpop.permute.xlu0 %388
        %s391 = scalar_lea.vmem %s293, 4 [#allocation10]
        %392 = vst.msk [vmem:[%s391] sm:$0xf] %vm365, %v389
        %393 = vrot.lane.b32.xlu0 %v369, 112
        %v394 = vpop.permute.xlu0 %393
        %s396 = scalar_lea.vmem %s279, 8 [#allocation7]
        %397 = vst.msk [vmem:[%s396] sm:$0xf] %vm365, %v394
        %398 = vrot.lane.b32.xlu0 %v369, 80
        %v399 = vpop.permute.xlu0 %398
        %s401 = scalar_lea.vmem %s286, 8 [#allocation8]
        %402 = vst.msk [vmem:[%s401] sm:$0xf] %vm365, %v399
        %403 = vrot.lane.b32.xlu0 %v369, 48
        %v404 = vpop.permute.xlu0 %403
        %s406 = scalar_lea.vmem %s293, 8 [#allocation10]
        %407 = vst.msk [vmem:[%s406] sm:$0xf] %vm365, %v404
        %408 = vrot.lane.b32.xlu0 %v369, 104
        %v409 = vpop.permute.xlu0 %408
        %s411 = scalar_lea.vmem %s279, 12 [#allocation7]
        %412 = vst.msk [vmem:[%s411] sm:$0xf] %vm365, %v409
        %413 = vrot.lane.b32.xlu0 %v369, 72
        %v414 = vpop.permute.xlu0 %413
        %s416 = scalar_lea.vmem %s286, 12 [#allocation8]
        %417 = vst.msk [vmem:[%s416] sm:$0xf] %vm365, %v414
        %418 = vrot.lane.b32.xlu0 %v369, 40
        %v419 = vpop.permute.xlu0 %418
        %s421 = scalar_lea.vmem %s293, 12 [#allocation10]
        %422 = vst.msk [vmem:[%s421] sm:$0xf] %vm365, %v419
        %s423 = sand.u32 %s119, 1
        %s424 = scalar_lea.sflag [#allocation4], %s423
        %s425 = sand.u32 %s119, 1
        %s426 = smul.addr %s425, 16
        %s427 = scalar_lea.vmem [#allocation7], %s426
        %s428 = sand.u32 %s27, 1
        %s429 = scalar_lea.sflag [#allocation9], %s428
        %s430 = sand.u32 %s147, 1
        %s431 = smul.addr %s430, 16
        %s432 = scalar_lea.vmem [#allocation8], %s431
        %s433 = sand.u32 %s27, 1
        %s434 = scalar_lea.sflag [#allocation9], %s433
        %s435 = sand.u32 %s175, 1
        %s436 = smul.addr %s435, 16
        %s437 = scalar_lea.vmem [#allocation10], %s436
        // Predicated region
        $region41: #{tpu_custom_call.1} parent=31 // pred_check
          %p438 = pneg %p129
        $region42: #{tpu_custom_call.1} parent=31 // pred_check_branch
          %440 = sbr.rel (%p438) target = $region44
        $region43: #{tpu_custom_call.1} parent=31 // pred_region
          %s442 = ssub.s32 256, 256
          %443 = vsyncadd %s424, %s442
          %s444 = smul.addr %s31, 4
          %s445 = sadd.s32 %s32, %s444
          %s446 = smul.addr %s445, 64
          %s447 = scalar_lea.hbm %s3, %s446
          %s448 = sshll.u32 %s427, 4
          %s449 = int_to_ptr.vmem [resolvable:$true] %s448
          %454 = dma.vmem_to_hbm [thread:$0]  %s449, 256, %s447, %s424, 64, 64, 4
        $region44: #{tpu_custom_call.1} parent=31 // pred_fallthru
          _
        // Predicated region
        $region45: #{tpu_custom_call.1} parent=31 // pred_check
          %p455 = pneg %p157
        $region46: #{tpu_custom_call.1} parent=31 // pred_check_branch
          %457 = sbr.rel (%p455) target = $region48
        $region47: #{tpu_custom_call.1} parent=31 // pred_region
          %s459 = ssub.s32 256, 256
          %460 = vsyncadd %s429, %s459
          %s461 = smul.addr %s31, 4
          %s462 = sadd.s32 %s32, %s461
          %s463 = smul.addr %s462, 64
          %s464 = scalar_lea.hbm %s4, %s463
          %s465 = sshll.u32 %s432, 4
          %s466 = int_to_ptr.vmem [resolvable:$true] %s465
          %471 = dma.vmem_to_hbm [thread:$0]  %s466, 256, %s464, %s429, 64, 64, 4
        $region48: #{tpu_custom_call.1} parent=31 // pred_fallthru
          _
        // Predicated region
        $region49: #{tpu_custom_call.1} parent=31 // pred_check
          %p472 = pneg %p185
        $region50: #{tpu_custom_call.1} parent=31 // pred_check_branch
          %474 = sbr.rel (%p472) target = $region52
        $region51: #{tpu_custom_call.1} parent=31 // pred_region
          %s476 = ssub.s32 256, 256
          %477 = vsyncadd %s434, %s476
          %s478 = smul.addr %s31, 4
          %s479 = sadd.s32 %s32, %s478
          %s480 = smul.addr %s479, 64
          %s481 = scalar_lea.hbm %s5, %s480
          %s482 = sshll.u32 %s437, 4
          %s483 = int_to_ptr.vmem [resolvable:$true] %s482
          %488 = dma.vmem_to_hbm [thread:$0]  %s483, 256, %s481, %s434, 64, 64, 4
        $region52: #{tpu_custom_call.1} parent=31 // pred_fallthru
          _
      $region32: #{tpu_custom_call.1} parent=5 // pred_fallthru
        _
      %p489 = scmp.le.s32.totalorder 2, %s22
      // Predicated region
      $region53: #{tpu_custom_call.1} parent=5 // pred_check
        %p490 = pneg %p489
      $region54: #{tpu_custom_call.1} parent=5 // pred_check_branch
        %492 = sbr.rel (%p490) target = $region56
      $region55: #{tpu_custom_call.1} parent=5 // pred_region
        %s493 = ssub.s32 %s22, 2
        // Predicated region
        $region57: #{tpu_custom_call.1} parent=55 // pred_check
          %p494 = pneg %p135
        $region58: #{tpu_custom_call.1} parent=55 // pred_check_branch
          %496 = sbr.rel (%p494) target = $region60
        $region59: #{tpu_custom_call.1} parent=55 // pred_region
          %s497 = sand.u32 %s120, 1
          %s498 = scalar_lea.sflag [#allocation4], %s497
          %s499 = sand.u32 %s120, 1
          %s500 = smul.addr %s499, 16
          %s501 = scalar_lea.vmem [#allocation7], %s500
          %502 = dma.done %s498, 256
        $region60: #{tpu_custom_call.1} parent=55 // pred_fallthru
          _
        // Predicated region
        $region61: #{tpu_custom_call.1} parent=55 // pred_check
          %p503 = pneg %p163
        $region62: #{tpu_custom_call.1} parent=55 // pred_check_branch
          %505 = sbr.rel (%p503) target = $region64
        $region63: #{tpu_custom_call.1} parent=55 // pred_region
          %s506 = sand.u32 %s28, 1
          %s507 = scalar_lea.sflag [#allocation9], %s506
          %s508 = sand.u32 %s148, 1
          %s509 = smul.addr %s508, 16
          %s510 = scalar_lea.vmem [#allocation8], %s509
          %511 = dma.done %s507, 256
        $region64: #{tpu_custom_call.1} parent=55 // pred_fallthru
          _
        // Predicated region
        $region65: #{tpu_custom_call.1} parent=55 // pred_check
          %p512 = pneg %p191
        $region66: #{tpu_custom_call.1} parent=55 // pred_check_branch
          %514 = sbr.rel (%p512) target = $region68
        $region67: #{tpu_custom_call.1} parent=55 // pred_region
          %s515 = sand.u32 %s28, 1
          %s516 = scalar_lea.sflag [#allocation9], %s515
          %s517 = sand.u32 %s176, 1
          %s518 = smul.addr %s517, 16
          %s519 = scalar_lea.vmem [#allocation10], %s518
          %520 = dma.done %s516, 256
        $region68: #{tpu_custom_call.1} parent=55 // pred_fallthru
          _
      $region56: #{tpu_custom_call.1} parent=5 // pred_fallthru
        _
    $region6: #{tpu_custom_call.1} parent=1 // loop_footer
      %s26 = sadd.s32 1, %s22
    $region7: #{tpu_custom_call.1} parent=1 // loop_footer_branch
      %21 = sbr.rel target = $region3
    $region8: #{tpu_custom_call.1} parent=1 // loop_exit
      _
    %521 = vsyncpa [#allocation3], 1
    %s522 = scalar_lea.sflag [#allocation3], 1
    %523 = vsyncpa %s522, 1
    %524 = vsyncpa [#allocation6], 1
    %525 = vsyncpa [#allocation4], 1
    %s526 = scalar_lea.sflag [#allocation4], 1
    %527 = vsyncpa %s526, 1
    %528 = vsyncpa [#allocation9], 1
    %s529 = scalar_lea.sflag [#allocation9], 1
    %530 = vsyncpa %s529, 1

</llo_original>
